<compile_context>
chip_gen: v5e
topology: v5e:2x2
jax: 0.10.0
libtpu: 0.0.40
codegen_flags: <defaults>
</compile_context>

<pallas_src>
import numpy as np
import jax
import jax.numpy as jnp
from jax.experimental import pallas as pl
from jax.experimental.pallas import tpu as pltpu

N_QUBITS = 8
N_CYCLES = 4
DIM = 2 ** N_QUBITS          # 256
HID = 10                     # MLP hidden width
N_ANG = N_CYCLES * N_QUBITS  # 32 encoding angles per sample


# ----------------------------------------------------------------------------------
# numpy helpers: constant matrices + deterministic trainable parameters (host glue)
# ----------------------------------------------------------------------------------
I2 = np.eye(2, dtype=np.complex128)


def bitmask(wire):
    return 1 << (N_QUBITS - 1 - wire)        # wire 0 = MSB


def kron_1q(u, wire):
    m = np.array([[1.0]], dtype=np.complex128)
    for w in range(N_QUBITS):
        m = np.kron(m, u if w == wire else I2)
    return m


def cnot_full(control, target):
    g = np.zeros((DIM, DIM), dtype=np.complex128)
    mc, mt = bitmask(control), bitmask(target)
    for j in range(DIM):
        k = j ^ mt if (j & mc) else j
        g[k, j] = 1.0
    return g


def rz2(theta):
    return np.array([[np.exp(-0.5j * theta), 0.0],
                     [0.0, np.exp(0.5j * theta)]], dtype=np.complex128)


def ry2(theta):
    c, s = np.cos(theta / 2), np.sin(theta / 2)
    return np.array([[c, -s], [s, c]], dtype=np.complex128)


def u3_2x2(theta, phi, lam):
    c, s = np.cos(theta / 2), np.sin(theta / 2)
    return np.array([[c, -np.exp(1j * lam) * s],
                     [np.exp(1j * phi) * s, np.exp(1j * (phi + lam)) * c]],
                    dtype=np.complex128)


def build_variational_unitary(rng):
    """Compose all trainable gates of QCNN.forward into one 256x256 unitary."""
    gates = []

    def p():
        return float(rng.uniform(-np.pi, np.pi))

    def RZ(w): gates.append(kron_1q(rz2(p()), w))
    def RY(w): gates.append(kron_1q(ry2(p()), w))
    def U3(w): gates.append(kron_1q(u3_2x2(p(), p(), p()), w))
    def CX(c, t): gates.append(cnot_full(c, t))

    def block(a, b):
        RZ(a); CX(a, b); RZ(b); RY(a); CX(b, a); RY(a); CX(a, b); RZ(b)

    # exactly the gate sequence of QCNN.forward (expval-only measurements are no-ops)
    block(1, 0); block(3, 2); block(5, 4); block(7, 6)
    U3(1); U3(3); U3(5); U3(7)
    block(3, 1); block(7, 5); block(5, 3)
    U3(3); U3(7)

    U = np.eye(DIM, dtype=np.complex128)
    for g in gates:
        U = g @ U
    return U


def build_ring_perm():
    """Basis permutation of a CNOT ring (control q -> target (q+1)%n), row-vector form."""
    p = np.arange(DIM)
    for q in range(N_QUBITS):
        mc, mt = bitmask(q), bitmask((q + 1) % N_QUBITS)
        gate_map = np.array([j ^ mt if (j & mc) else j for j in range(DIM)])
        p = gate_map[p]
    M = np.zeros((DIM, DIM), dtype=np.float64)
    M[np.arange(DIM), p] = 1.0
    return M, p


# ----------------------------------------------------------------------------------
# pltpu.roll direction probe (robustness: pin which shift means x[j - m] vs x[j + m])
# ----------------------------------------------------------------------------------
def _roll_probe_kernel(x_ref, o_ref):
    o_ref[...] = pltpu.roll(x_ref[...], shift=1, axis=1)


_ROLL_IS_NUMPY = None


def _roll_is_numpy():
    """True iff pltpu.roll matches np.roll semantics: out[i] = in[(i - shift) % N]."""
    global _ROLL_IS_NUMPY
    if _ROLL_IS_NUMPY is None:
        x = jnp.tile(jnp.arange(DIM, dtype=jnp.float32)[None, :], (8, 1))
        vmem = pl.BlockSpec(memory_space=pltpu.MemorySpace.VMEM)
        y = pl.pallas_call(
            _roll_probe_kernel,
            out_shape=jax.ShapeDtypeStruct((8, DIM), jnp.float32),
            in_specs=[vmem],
            out_specs=vmem,
        )(x)
        _ROLL_IS_NUMPY = bool(np.asarray(y)[0, 0] > 100.0)   # np.roll -> 255, else -> 1
    return _ROLL_IS_NUMPY


# ----------------------------------------------------------------------------------
# Pallas kernel: statevector evolution + <Z> expectations + MLP head + sigmoid
# ----------------------------------------------------------------------------------
def make_qcnn_kernel(roll_is_numpy: bool):
    def qcnn_kernel(theta_ref, phi_ref, ring_ref, wblk_ref,
                    w1_ref, b1_ref, w2_ref, b2_ref, out_ref):
        TB = out_ref.shape[0]
        hp = jax.lax.Precision.HIGHEST

        # per-wire lane masks / Z-sign vectors, computed ONCE (hoisted out of the loop)
        lane = jax.lax.broadcasted_iota(jnp.int32, (1, DIM), 1)
        zsign, bit_zero = [], []
        for q in range(N_QUBITS):
            m = 1 << (N_QUBITS - 1 - q)
            bz = (lane & m) == 0
            bit_zero.append(bz)
            zsign.append(jnp.where(bz, 1.0, -1.0).astype(jnp.float32))

        # all encoding-angle trig, hoisted & vectorized once: (TB, 32)
        ct_all = jnp.cos(0.5 * theta_ref[...])
        st_all = jnp.sin(0.5 * theta_ref[...])
        cp_all = jnp.cos(0.5 * phi_ref[...])
        sp_all = jnp.sin(0.5 * phi_ref[...])

        # |0...0> initial state
        lane_b = jax.lax.broadcasted_iota(jnp.int32, (TB, DIM), 1)
        re = (lane_b == 0).astype(jnp.float32)
        im = jnp.zeros((TB, DIM), jnp.float32)

        def xor_shift(x, q):
            # y[:, j] = x[:, j ^ m] with m = 1 << (7 - q)
            m = 1 << (N_QUBITS - 1 - q)
            if 2 * m == DIM:
                # wire 0: roll by 128 == roll by -128 on a 256-lane axis -> no select
                return pltpu.roll(x, shift=m, axis=1)
            r_m = pltpu.roll(x, shift=m, axis=1)          # numpy conv: x[j - m]
            r_n = pltpu.roll(x, shift=DIM - m, axis=1)    # numpy conv: x[j + m]
            up, down = (r_n, r_m) if roll_is_numpy else (r_m, r_n)
            return jnp.where(bit_zero[q], up, down)

        ring = ring_ref[...]
        for c in range(N_CYCLES):
            for q in range(N_QUBITS):
                col = c * N_QUBITS + q
                zq = zsign[q]
                # hoisted lane broadcasts; zq folded into the sin coefficients
                ct = jnp.broadcast_to(ct_all[:, col:col + 1], (TB, DIM))
                cz = jnp.broadcast_to(cp_all[:, col:col + 1], (TB, DIM))
                stz = st_all[:, col:col + 1] * zq          # (TB, DIM)
                szq = sp_all[:, col:col + 1] * zq          # (TB, DIM)

                # RY(theta) on wire q -- off-diagonal term via XOR-shift (XLU rolls)
                re_sw = xor_shift(re, q)
                im_sw = xor_shift(im, q)
                re, im = ct * re - stz * re_sw, ct * im - stz * im_sw

                # RZ(phi) on wire q -- diagonal phase
                re, im = cz * re + szq * im, cz * im - szq * re

            if c < N_CYCLES - 1:
                # entangling CNOT ring: two (TB,256)@(256,256) permutation matmuls on the
                # (idle) MXU -- no sublane concat/split of the state is required.
                re = jnp.dot(re, ring, preferred_element_type=jnp.float32, precision=hp)
                im = jnp.dot(im, ring, preferred_element_type=jnp.float32, precision=hp)
            # (last cycle's ring is folded into wblk on the host)

        # all trainable gates + final ring, pre-composed into one real 512x512 block matmul
        s = jnp.concatenate([re, im], axis=1)                          # (TB, 512)
        f = jnp.dot(s, wblk_ref[...], preferred_element_type=jnp.float32, precision=hp)
        fre, fim = f[:, :DIM], f[:, DIM:]

        # PauliZ expectations on wires 3 and 7
        prob = fre * fre + fim * fim
        e3 = jnp.sum(prob * zsign[3], axis=1, keepdims=True)          # (TB, 1)
        e7 = jnp.sum(prob * zsign[7], axis=1, keepdims=True)          # (TB, 1)

        # MLP head: Linear(2,10) -> tanh -> Linear(10,1) -> sigmoid
        h = jnp.tanh(e3 * w1_ref[0:1, :] + e7 * w1_ref[1:2, :] + b1_ref[...])   # (TB, 10)
        logit = jnp.sum(h * w2_ref[...], axis=1, keepdims=True) + b2_ref[...]   # (TB, 1)
        out_ref[...] = jax.nn.sigmoid(logit)

    return qcnn_kernel


def qcnn_forward(theta, phi, consts, *, block_b=64):
    """theta, phi: (B, N_CYCLES, N_QUBITS) float32 encoding angles.

    block_b: batch tile (multiple of 8). 64 is a safe default on all generations;
    sweep to 128 on v6e/v7x if the bundle dump shows no ld/st saturation from spills.
    """
    B = theta.shape[0]
    th = jnp.reshape(theta, (B, N_ANG)).astype(jnp.float32)   # lane-dense angles
    ph = jnp.reshape(phi, (B, N_ANG)).astype(jnp.float32)

    block_b = max(8, (block_b // 8) * 8)
    B8 = pl.cdiv(B, 8) * 8                  # batch rounded up to a sublane multiple
    TB = min(block_b, B8)
    # v7x megacore: ensure the "parallel" batch grid has >= 2 steps whenever the batch
    # can be split (so both TensorCores get work); harmless on 1-TC v5e/v6e.
    if TB > 8 and B8 <= TB:
        TB = min(block_b, max(8, ((pl.cdiv(B8, 2) + 7) // 8) * 8))
    Bp = pl.cdiv(B8, TB) * TB
    if Bp != B:
        th = jnp.pad(th, ((0, Bp - B), (0, 0)))
        ph = jnp.pad(ph, ((0, Bp - B), (0, 0)))

    ring, wblk, w1, b1, w2, b2 = consts
    kernel = make_qcnn_kernel(_roll_is_numpy())

    angle_spec = pl.BlockSpec((TB, N_ANG), lambda i: (i, 0))
    const_spec = lambda shp: pl.BlockSpec(shp, lambda i: (0, 0))   # stays resident

    out = pl.pallas_call(
        kernel,
        out_shape=jax.ShapeDtypeStruct((Bp, 1), jnp.float32),
        grid=(Bp // TB,),
        in_specs=[angle_spec, angle_spec,
                  const_spec((DIM, DIM)),
                  const_spec((2 * DIM, 2 * DIM)),
                  const_spec((2, HID)), const_spec((1, HID)),
                  const_spec((1, HID)), const_spec((1, 1))],
        out_specs=pl.BlockSpec((TB, 1), lambda i: (i, 0)),
        compiler_params=pltpu.CompilerParams(
            dimension_semantics=("parallel",),
            vmem_limit_bytes=32 * 1024 * 1024),
    )(th, ph, ring, wblk, w1, b1, w2, b2)
    return out[:B]     # drop padded rows (their angles are garbage)


# ----------------------------------------------------------------------------------
# pure numpy reference (complex128) for verification
# ----------------------------------------------------------------------------------
def reference_forward(theta_np, phi_np, U_var, ring_p, W1t, b1, W2, b2):
    B = theta_np.shape[0]
    idx = np.arange(DIM)
    zv = lambda w: np.where((idx & bitmask(w)) > 0, -1.0, 1.0)
    outs = []
    for b in range(B):
        state = np.zeros(DIM, dtype=np.complex128)
        state[0] = 1.0
        for c in range(N_CYCLES):
            for q in range(N_QUBITS):
                state = kron_1q(ry2(theta_np[b, c, q]), q) @ state
                state = kron_1q(rz2(phi_np[b, c, q]), q) @ state
            new = np.zeros_like(state)
            new[ring_p] = state
            state = new
        state = U_var @ state
        prob = np.abs(state) ** 2
        e3, e7 = np.sum(zv(3) * prob), np.sum(zv(7) * prob)
        h = np.tanh(e3 * W1t[0] + e7 * W1t[1] + b1[0])
        logit = np.sum(h * W2[0]) + b2[0, 0]
        outs.append(1.0 / (1.0 + np.exp(-logit)))
    return np.array(outs).reshape(B, 1)


# ----------------------------------------------------------------------------------
if __name__ == "__main__":
    B = 5            # odd + > 2: exercises padding and the precision check
    key = jax.random.PRNGKey(0)
    kt, kp = jax.random.split(key)
    theta = jax.random.uniform(kt, (B, N_CYCLES, N_QUBITS), jnp.float32, -np.pi, np.pi)
    phi = jax.random.uniform(kp, (B, N_CYCLES, N_QUBITS), jnp.float32, -np.pi, np.pi)

    # deterministic trainable parameters
    rng = np.random.default_rng(0)
    U_var = build_variational_unitary(rng)
    W1t = rng.uniform(-0.5, 0.5, (2, HID)).astype(np.float32)   # Linear(2,10).weight.T
    b1 = rng.uniform(-0.5, 0.5, (1, HID)).astype(np.float32)
    W2 = rng.uniform(-0.5, 0.5, (1, HID)).astype(np.float32)    # Linear(10,1).weight
    b2 = rng.uniform(-0.5, 0.5, (1, 1)).astype(np.float32)

    ring64, ring_p = build_ring_perm()

    # fold the LAST cycle's CNOT ring into the trainable unitary (row form: s @ ring @ U^T),
    # then pack the complex matmul into one real 512x512 block matrix.
    W_fold = ring64 @ U_var.T                                   # complex128 (256,256)
    Wre = np.ascontiguousarray(W_fold.real).astype(np.float32)
    Wim = np.ascontiguousarray(W_fold.imag).astype(np.float32)
    Wblk = np.block([[Wre, Wim], [-Wim, Wre]]).astype(np.float32)   # (512, 512)
    ring_f32 = ring64.astype(np.float32)

    consts = tuple(jnp.asarray(a) for a in (ring_f32, Wblk, W1t, b1, W2, b2))

    out = qcnn_forward(theta, phi, consts)
    out = jax.block_until_ready(out)

    ref = reference_forward(np.asarray(theta, dtype=np.float64),
                            np.asarray(phi, dtype=np.float64),
                            U_var, ring_p, W1t, b1, W2, b2)
    assert out.shape == (B, 1)
    err = np.max(np.abs(np.asarray(out, dtype=np.float64) - ref))
    assert err < 1e-3, (err, np.asarray(out), ref)
    print("KERNEL_OK")
</pallas_src>

<mosaic_0001>
module attributes {stable_mosaic.version = 11 : i64} {
  func.func @_roll_probe_kernel(%arg0: memref<8x256xf32, #tpu.memory_space<vmem>>, %arg1: memref<8x256xf32, #tpu.memory_space<vmem>>) attributes {dimension_semantics = [], scalar_prefetch = 0 : i64, scratch_operands = 0 : i64, tpu.core_type = #tpu.core_type<tc>} {
    %c0 = arith.constant 0 : index
    %c0_0 = arith.constant 0 : index
    %0 = vector.load %arg0[%c0, %c0_0] : memref<8x256xf32, #tpu.memory_space<vmem>>, vector<8x256xf32>
    %c1_i32 = arith.constant 1 : i32
    %1 = tpu.dynamic_rotate %0 by %c1_i32 dim 1 : vector<8x256xf32>, i32 -> vector<8x256xf32>
    %c0_1 = arith.constant 0 : index
    %c0_2 = arith.constant 0 : index
    %2 = vector.load %arg1[%c0_1, %c0_2] : memref<8x256xf32, #tpu.memory_space<vmem>>, vector<8x256xf32>
    tpu.vector_store %arg1[%c0_1, %c0_2], %1 {strides = array<i32>} : memref<8x256xf32, #tpu.memory_space<vmem>>, vector<8x256xf32>,
    return
  }
}

</mosaic_0001>

<llo_original>
// kernel: tpu_custom_call.1
$region0: #{tpu_custom_call.1}
  #allocation0 [shape = 'u32[]', space=smem, size = 0x4, offset = 0x4, fixed_abs, tag = 'smem constant byte address 0x4 - core index']
  #allocation1 [shape = 'u32[72,128]{1,0:T(1,128)}', space=vmem, size = 0x9000, scoped, tag = 'internal scratch']
  %s0 = inlined_call_operand.hbm [shape: f32[8,256], index: 0, kind: input, shape index: {}]
  %s1 = inlined_call_operand.hbm [shape: f32[8,256], index: 1, kind: output, shape index: {}]
  %s2 = sld [smem:[#allocation0]]
  $region18: #{tpu_custom_call.1} parent=0
    _
  %s4 = ssub.s32 1, %s2
  %s5 = scalar_select 0, %s4, %s2
  $region1: #{tpu_custom_call.1} parent=0
    #allocation2 [shape = 'u8[8192]{0}', space=vmem, size = 0x2000, scoped, tag = 'input window, operand 0, single buffered']
    #allocation3 [shape = 's32[1]{0}', space=sflag, size = 0x4, scoped, tag = 'scoped memory for tpu_custom_call.1']
    #allocation4 [shape = 's32[1]{0}', space=sflag, size = 0x4, scoped, tag = 'scoped memory for tpu_custom_call.1']
    #allocation5 [shape = 'u8[8192]{0}', space=vmem, size = 0x2000, scoped, tag = 'output window, operand 0, single buffered']
    %6 = vsyncpa [#allocation3], 0
    %7 = vsyncpa [#allocation4], 0
    // Predicated region
    $region2: #{tpu_custom_call.1} parent=1 // pred_check
      _
    $region3: #{tpu_custom_call.1} parent=1 // pred_check_branch
      %9 = sbr.rel (0) target = $region5
    $region4: #{tpu_custom_call.1} parent=1 // pred_region
      %11 = vsyncadd [#allocation3], 0
      %s13 = sshll.u32 %s0, 4
      %s14 = int_to_ptr.hbm [resolvable:$true] %s13
      %s15 = sshll.u32 [#allocation2], 4
      %s16 = int_to_ptr.vmem [resolvable:$true] %s15
      %18 = dma.hbm_to_vmem [thread:$0]  %s14, 256, %s16, [#allocation3]
    $region5: #{tpu_custom_call.1} parent=1 // pred_fallthru
      _
    // Predicated region
    $region6: #{tpu_custom_call.1} parent=1 // pred_check
      _
    $region7: #{tpu_custom_call.1} parent=1 // pred_check_branch
      %20 = sbr.rel (0) target = $region9
    $region8: #{tpu_custom_call.1} parent=1 // pred_region
      %22 = dma.done [#allocation3], 256
    $region9: #{tpu_custom_call.1} parent=1 // pred_fallthru
      _
    %v23 = vld [vmem:[#allocation2] sm:$0xff]
    %v24 = vld [vmem:[#allocation2 + $0x8] sm:$0xff]
    %25 = vrot.lane.b32.xlu0 %v23, 1
    %v26 = vpop.permute.xlu0 %25
    %27 = vrot.lane.b32.xlu0 %v24, 1
    %v28 = vpop.permute.xlu0 %27
    %v29 = vlaneseq
    %v30 = vand.u32 %v29, 127
    %vm31 = vcmp.lt.s32.totalorder %v30, 1
    %v32 = vsel %vm31, %v26, %v28
    %v33 = vsel %vm31, %v28, %v26
    %34 = vst [vmem:[#allocation5] sm:$0xff] %v33
    %35 = vst [vmem:[#allocation5 + $0x8] sm:$0xff] %v32
    // Predicated region
    $region10: #{tpu_custom_call.1} parent=1 // pred_check
      _
    $region11: #{tpu_custom_call.1} parent=1 // pred_check_branch
      %37 = sbr.rel (0) target = $region13
    $region12: #{tpu_custom_call.1} parent=1 // pred_region
      %39 = vsyncadd [#allocation4], 0
      %s41 = sshll.u32 [#allocation5], 4
      %s42 = int_to_ptr.vmem [resolvable:$true] %s41
      %s43 = sshll.u32 %s1, 4
      %s44 = int_to_ptr.hbm [resolvable:$true] %s43
      %46 = dma.vmem_to_hbm [thread:$0]  %s42, 256, %s44, [#allocation4]
    $region13: #{tpu_custom_call.1} parent=1 // pred_fallthru
      _
    // Predicated region
    $region14: #{tpu_custom_call.1} parent=1 // pred_check
      _
    $region15: #{tpu_custom_call.1} parent=1 // pred_check_branch
      %48 = sbr.rel (0) target = $region17
    $region16: #{tpu_custom_call.1} parent=1 // pred_region
      %50 = dma.done [#allocation4], 256
    $region17: #{tpu_custom_call.1} parent=1 // pred_fallthru
      _
    %51 = vsyncpa [#allocation3], 1
    %52 = vsyncpa [#allocation4], 1

</llo_original>
